<compile_context>
chip_gen: v5e
topology: v5e:2x2
jax: 0.10.0
libtpu: 0.0.40
codegen_flags: <defaults>
</compile_context>

<pallas_src>
from dataclasses import dataclass

import jax
import jax.numpy as jnp
from jax.experimental import pallas as pl
from jax.experimental.pallas import tpu as pltpu


# Conservative across v5e / v6e / v7x: v7x has only 64 MiB physical VMEM, so
# keep the double-buffered working set around ~32-36 MiB and request 48 MiB.
_VMEM_LIMIT_BYTES = 48 * 1024 * 1024
_SINGLE_BUFFER_BUDGET = 16 * 1024 * 1024   # x block + down_w block, single-buffered
_TK_MIN = 256                              # keep per-step DMA >> ~0.35us step overhead


def _sublane_gran(dtype):
    # 8 for f32, 16 for bf16, 32 for int8/fp8 (packed-tile constraint).
    return max(8, 32 // jnp.dtype(dtype).itemsize)


def _pick_tile(dim, preferred, gran):
    """Largest tile <= preferred that is either the full dim or a multiple of
    `gran` dividing `dim` evenly, so every block is full-size and layout-legal
    and the wrapper never pads / slices."""
    if dim <= preferred:
        return dim
    t = (preferred // gran) * gran
    while t >= gran:
        if dim % t == 0:
            return t
        t -= gran
    # Awkward dim with no gran-multiple divisor: fall back to one full block
    # (always legal; only reachable for unusual shapes).
    return dim


def _baseline_kernel(x_ref, wd_ref, bd_ref, wu_ref, bu_ref, out_ref, acc_ref):
    k = pl.program_id(2)

    @pl.when(k == 0)
    def _():
        acc_ref[...] = jnp.zeros_like(acc_ref)

    # Folded up-projection: fold up_w into this K-block of down_w first
    # (cheap (tk,Dd)x(Dd,1) GEMV), then a (ts,tk)x(tk,1) GEMV against x.
    x_blk = x_ref[...]                                            # (ts, tk)
    w_eff = jnp.dot(wd_ref[...], wu_ref[...],
                    preferred_element_type=jnp.float32)           # (tk, 1)
    acc_ref[...] += jnp.dot(x_blk, w_eff.astype(x_blk.dtype),
                            preferred_element_type=jnp.float32)   # (ts, 1)

    @pl.when(k == pl.num_programs(2) - 1)
    def _():
        # Scalar bias: down_b @ up_w + up_b   (exact, per router)
        bias = jnp.dot(bd_ref[...].astype(jnp.float32),
                       wu_ref[...].astype(jnp.float32),
                       preferred_element_type=jnp.float32)        # (1, 1)
        bias = bias + bu_ref[...].astype(jnp.float32)
        out_ref[...] = (acc_ref[...] + bias).astype(out_ref.dtype)


@jax.jit
def baseline_forward(new_x, down_w, down_b, up_w, up_b):
    R, S, D_in = new_x.shape
    D_down = down_w.shape[-1]

    x_is = jnp.dtype(new_x.dtype).itemsize
    w_is = jnp.dtype(down_w.dtype).itemsize
    sub_gran = _sublane_gran(new_x.dtype)

    # --- Seq tile first: weight traffic = ceil(S/ts) * D_in * D_down * w_is
    # per router, so ts is the lever that reduces the dominant HBM bytes. ---
    ts_cap = (_SINGLE_BUFFER_BUDGET - w_is * _TK_MIN * D_down) // max(x_is * _TK_MIN, 1)
    ts_cap = max(sub_gran, ts_cap)
    ts = _pick_tile(S, min(S, ts_cap), sub_gran)

    # --- K tile second: as big as the remaining budget allows (mult. of 128). ---
    tk_cap = _SINGLE_BUFFER_BUDGET // max(x_is * ts + w_is * D_down, 1)
    tk_pref = max(128, (tk_cap // 128) * 128)
    tk = _pick_tile(D_in, min(D_in, tk_pref), 128)

    n_seq = S // ts
    n_k = D_in // tk
    grid = (R, n_seq, n_k)

    # Small params: reshape so every block equals the full trailing dims
    # (layout-legal, no data movement of consequence).
    db3 = down_b.reshape(R, 1, D_down)
    ub3 = up_b.reshape(R, 1, 1)
    # up_w stays in its natural (R, D_down, 1) layout.

    # Advisory cost estimate (actual folded-kernel work & bytes).
    flops = 2 * R * n_seq * D_in * D_down + 2 * R * S * D_in
    bytes_accessed = (R * S * D_in * x_is                    # x, streamed once
                      + R * n_seq * D_in * D_down * w_is     # down_w per seq block
                      + R * S * x_is                         # output
                      + R * (2 * D_down + 2) * w_is)         # small params

    return pl.pallas_call(
        _baseline_kernel,
        out_shape=jax.ShapeDtypeStruct((R, S, 1), new_x.dtype),
        grid_spec=pltpu.PrefetchScalarGridSpec(
            num_scalar_prefetch=0,
            grid=grid,
            in_specs=[
                pl.BlockSpec((None, ts, tk), lambda r, i, k: (r, i, k)),       # x
                pl.BlockSpec((None, tk, D_down), lambda r, i, k: (r, k, 0)),   # down_w
                pl.BlockSpec((None, 1, D_down), lambda r, i, k: (r, 0, 0)),    # down_b
                pl.BlockSpec((None, D_down, 1), lambda r, i, k: (r, 0, 0)),    # up_w
                pl.BlockSpec((None, 1, 1), lambda r, i, k: (r, 0, 0)),         # up_b
            ],
            out_specs=pl.BlockSpec((None, ts, 1), lambda r, i, k: (r, i, 0)),
            scratch_shapes=[pltpu.VMEM((ts, 1), jnp.float32)],
        ),
        compiler_params=pltpu.CompilerParams(
            dimension_semantics=("parallel", "parallel", "arbitrary"),
            vmem_limit_bytes=_VMEM_LIMIT_BYTES),
        cost_estimate=pl.CostEstimate(flops=flops, transcendentals=0,
                                      bytes_accessed=bytes_accessed),
    )(new_x, down_w, db3, up_w, ub3)


@dataclass
class Config:
    model_dim: int = 256
    num_routers: int = 2
    num_adapters: int = 4
    bl_reduction_factor: int = 8


class Baseline:
    """JAX/Pallas equivalent of the PyTorch Baseline adapter module."""

    def __init__(self, config, in_dim=8192, *, key=None, dtype=jnp.float32):
        # dtype=jnp.bfloat16 halves the dominant HBM (weight) traffic with f32
        # MXU accumulation; default f32 matches the PyTorch module exactly.
        self.config = config
        self.model_dim = config.model_dim
        self.n_routers = config.num_routers
        self.num_adapters = config.num_adapters
        self.in_dim = self.model_dim if in_dim is None else in_dim
        self.down_sample_size = self.in_dim // config.bl_reduction_factor

        if key is None:
            key = jax.random.PRNGKey(0)
        k1, k2 = jax.random.split(key)
        self.down_samplers_weights = (0.01 * jax.random.normal(
            k1, (self.n_routers, self.in_dim, self.down_sample_size))).astype(dtype)
        self.down_samplers_bias = jnp.zeros(
            (self.n_routers, self.down_sample_size), dtype)
        self.up_samplers_weights = (0.01 * jax.random.normal(
            k2, (self.n_routers, self.down_sample_size, 1))).astype(dtype)
        self.up_samplers_bias = jnp.zeros((self.n_routers, 1), dtype)

    def __call__(self, new_x):
        return baseline_forward(new_x,
                                self.down_samplers_weights,
                                self.down_samplers_bias,
                                self.up_samplers_weights,
                                self.up_samplers_bias)


if __name__ == "__main__":
    key = jax.random.PRNGKey(0)
    kx, kp, kb1, kb2 = jax.random.split(key, 4)

    cfg = Config(model_dim=256, num_routers=2, num_adapters=4,
                 bl_reduction_factor=8)
    seq, in_dim = 8, 256                       # small demo shapes

    mod = Baseline(cfg, in_dim=in_dim, key=kp)
    # Non-zero biases so the bias path is actually exercised.
    mod.down_samplers_bias = 0.1 * jax.random.normal(
        kb1, mod.down_samplers_bias.shape, jnp.float32)
    mod.up_samplers_bias = 0.1 * jax.random.normal(
        kb2, mod.up_samplers_bias.shape, jnp.float32)

    x = jax.random.normal(kx, (cfg.num_routers, seq, in_dim), jnp.float32)

    y = jax.block_until_ready(mod(x))

    # Pure-JAX reference (high precision).
    z_ref = jnp.matmul(x, mod.down_samplers_weights,
                       precision=jax.lax.Precision.HIGHEST) \
            + mod.down_samplers_bias[:, None, :]
    y_ref = jnp.matmul(z_ref, mod.up_samplers_weights,
                       precision=jax.lax.Precision.HIGHEST) \
            + mod.up_samplers_bias[:, None, :]

    rel_err = jnp.max(jnp.abs(y - y_ref)) / (jnp.max(jnp.abs(y_ref)) + 1e-12)
    if y.shape == (cfg.num_routers, seq, 1) and float(rel_err) < 1e-2:
        print("KERNEL_OK")
    else:
        print(f"MISMATCH: shape={y.shape} rel_err={float(rel_err)}")
</pallas_src>

<mosaic_0001>
module attributes {stable_mosaic.version = 11 : i64} {
  func.func @_baseline_kernel(%arg0: i32, %arg1: i32, %arg2: i32, %arg3: memref<1x8x256xf32, #tpu.memory_space<vmem>>, %arg4: memref<1x256x32xf32, #tpu.memory_space<vmem>>, %arg5: memref<1x1x32xf32, #tpu.memory_space<vmem>>, %arg6: memref<1x32x1xf32, #tpu.memory_space<vmem>>, %arg7: memref<1x1x1xf32, #tpu.memory_space<vmem>>, %arg8: memref<1x8x1xf32, #tpu.memory_space<vmem>>, %arg9: memref<8x1xf32, #tpu.memory_space<vmem>>) attributes {dimension_semantics = [#tpu.dimension_semantics<parallel>, #tpu.dimension_semantics<parallel>, #tpu.dimension_semantics<arbitrary>], iteration_bounds = array<i64: 2, 1, 1>, scalar_prefetch = 0 : i64, scratch_operands = 1 : i64, tpu.core_type = #tpu.core_type<tc>, window_params = [{transform_indices = @transform_0, window_bounds = array<i64: 1, 8, 256>}, {transform_indices = @transform_1, window_bounds = array<i64: 1, 256, 32>}, {transform_indices = @transform_2, window_bounds = array<i64: 1, 1, 32>}, {transform_indices = @transform_3, window_bounds = array<i64: 1, 32, 1>}, {transform_indices = @transform_4, window_bounds = array<i64: 1, 1, 1>}, {transform_indices = @transform_5, window_bounds = array<i64: 1, 8, 1>}]} {
    %c0_i32 = arith.constant 0 : i32
    %0 = arith.cmpi eq, %arg2, %c0_i32 : i32
    %1 = arith.extui %0 : i1 to i32
    %c0_i32_0 = arith.constant 0 : i32
    %2 = arith.cmpi ne, %1, %c0_i32_0 : i32
    scf.if %2 {
      %cst_16 = arith.constant 0.000000e+00 : f32
      %17 = vector.broadcast %cst_16 : f32 to vector<8x1xf32>
      %c0_17 = arith.constant 0 : index
      %c0_18 = arith.constant 0 : index
      %18 = vector.load %arg9[%c0_17, %c0_18] : memref<8x1xf32, #tpu.memory_space<vmem>>, vector<8x1xf32>
      tpu.vector_store %arg9[%c0_17, %c0_18], %17 {strides = array<i32>} : memref<8x1xf32, #tpu.memory_space<vmem>>, vector<8x1xf32>,
    } else {
    }
    %c0 = arith.constant 0 : index
    %c0_1 = arith.constant 0 : index
    %c0_2 = arith.constant 0 : index
    %3 = vector.load %arg3[%c0, %c0_1, %c0_2] : memref<1x8x256xf32, #tpu.memory_space<vmem>>, vector<1x8x256xf32>
    %4 = vector.shape_cast %3 : vector<1x8x256xf32> to vector<8x256xf32>
    %c0_3 = arith.constant 0 : index
    %c0_4 = arith.constant 0 : index
    %c0_5 = arith.constant 0 : index
    %5 = vector.load %arg4[%c0_3, %c0_4, %c0_5] : memref<1x256x32xf32, #tpu.memory_space<vmem>>, vector<1x256x32xf32>
    %6 = vector.shape_cast %5 : vector<1x256x32xf32> to vector<256x32xf32>
    %c0_6 = arith.constant 0 : index
    %c0_7 = arith.constant 0 : index
    %c0_8 = arith.constant 0 : index
    %7 = vector.load %arg6[%c0_6, %c0_7, %c0_8] : memref<1x32x1xf32, #tpu.memory_space<vmem>>, vector<1x32x1xf32>
    %8 = vector.shape_cast %7 : vector<1x32x1xf32> to vector<32x1xf32>
    %cst = arith.constant dense<0.000000e+00> : vector<256x1xf32>
    %9 = tpu.matmul %6, %8, %cst {dimension_numbers = #tpu.dot_dimension_numbers<[1], [0], [0], [1], [0, 0, 1, 1], [], []>} : vector<256x32xf32>, vector<32x1xf32>, vector<256x1xf32> -> vector<256x1xf32>
    %c0_9 = arith.constant 0 : index
    %c0_10 = arith.constant 0 : index
    %10 = vector.load %arg9[%c0_9, %c0_10] : memref<8x1xf32, #tpu.memory_space<vmem>>, vector<8x1xf32>
    %cst_11 = arith.constant dense<0.000000e+00> : vector<8x1xf32>
    %11 = tpu.matmul %4, %9, %cst_11 {dimension_numbers = #tpu.dot_dimension_numbers<[1], [0], [0], [1], [0, 0, 1, 1], [], []>} : vector<8x256xf32>, vector<256x1xf32>, vector<8x1xf32> -> vector<8x1xf32>
    %12 = arith.addf %10, %11 : vector<8x1xf32>
    %c0_12 = arith.constant 0 : index
    %c0_13 = arith.constant 0 : index
    %13 = vector.load %arg9[%c0_12, %c0_13] : memref<8x1xf32, #tpu.memory_space<vmem>>, vector<8x1xf32>
    tpu.vector_store %arg9[%c0_12, %c0_13], %12 {strides = array<i32>} : memref<8x1xf32, #tpu.memory_space<vmem>>, vector<8x1xf32>,
    %c0_i32_14 = arith.constant 0 : i32
    %14 = arith.cmpi eq, %arg2, %c0_i32_14 : i32
    %15 = arith.extui %14 : i1 to i32
    %c0_i32_15 = arith.constant 0 : i32
    %16 = arith.cmpi ne, %15, %c0_i32_15 : i32
    scf.if %16 {
      %c0_16 = arith.constant 0 : index
      %c0_17 = arith.constant 0 : index
      %c0_18 = arith.constant 0 : index
      %17 = vector.load %arg5[%c0_16, %c0_17, %c0_18] : memref<1x1x32xf32, #tpu.memory_space<vmem>>, vector<1x1x32xf32>
      %18 = vector.shape_cast %17 : vector<1x1x32xf32> to vector<1x32xf32>
      %c0_19 = arith.constant 0 : index
      %c0_20 = arith.constant 0 : index
      %c0_21 = arith.constant 0 : index
      %19 = vector.load %arg6[%c0_19, %c0_20, %c0_21] : memref<1x32x1xf32, #tpu.memory_space<vmem>>, vector<1x32x1xf32>
      %20 = vector.shape_cast %19 : vector<1x32x1xf32> to vector<32x1xf32>
      %cst_22 = arith.constant dense<0.000000e+00> : vector<1x1xf32>
      %21 = tpu.matmul %18, %20, %cst_22 {dimension_numbers = #tpu.dot_dimension_numbers<[1], [0], [0], [1], [0, 0, 1, 1], [], []>} : vector<1x32xf32>, vector<32x1xf32>, vector<1x1xf32> -> vector<1x1xf32>
      %c0_23 = arith.constant 0 : index
      %c0_24 = arith.constant 0 : index
      %c0_25 = arith.constant 0 : index
      %22 = vector.load %arg7[%c0_23, %c0_24, %c0_25] : memref<1x1x1xf32, #tpu.memory_space<vmem>>, vector<1x1x1xf32>
      %23 = vector.shape_cast %22 : vector<1x1x1xf32> to vector<1x1xf32>
      %24 = arith.addf %21, %23 : vector<1x1xf32>
      %c0_26 = arith.constant 0 : index
      %c0_27 = arith.constant 0 : index
      %25 = vector.load %arg9[%c0_26, %c0_27] : memref<8x1xf32, #tpu.memory_space<vmem>>, vector<8x1xf32>
      %26 = vector.broadcast %24 : vector<1x1xf32> to vector<8x1xf32>
      %27 = arith.addf %25, %26 : vector<8x1xf32>
      %c0_28 = arith.constant 0 : index
      %c0_29 = arith.constant 0 : index
      %c0_30 = arith.constant 0 : index
      %28 = vector.load %arg8[%c0_28, %c0_29, %c0_30] : memref<1x8x1xf32, #tpu.memory_space<vmem>>, vector<1x8x1xf32>
      %29 = vector.shape_cast %28 : vector<1x8x1xf32> to vector<8x1xf32>
      %30 = vector.shape_cast %27 : vector<8x1xf32> to vector<1x8x1xf32>
      tpu.vector_store %arg8[%c0_28, %c0_29, %c0_30], %30 {strides = array<i32>} : memref<1x8x1xf32, #tpu.memory_space<vmem>>, vector<1x8x1xf32>,
    } else {
    }
    return
  }
  func.func @transform_0(%arg0: i32, %arg1: i32, %arg2: i32) -> (i32, i32, i32) {
    %c0_i32 = arith.constant 0 : i32
    return %arg0, %arg1, %arg2 : i32, i32, i32
  }
  func.func @transform_1(%arg0: i32, %arg1: i32, %arg2: i32) -> (i32, i32, i32) {
    %c0_i32 = arith.constant 0 : i32
    %c0_i32_0 = arith.constant 0 : i32
    return %arg0, %arg2, %c0_i32 : i32, i32, i32
  }
  func.func @transform_2(%arg0: i32, %arg1: i32, %arg2: i32) -> (i32, i32, i32) {
    %c0_i32 = arith.constant 0 : i32
    %c0_i32_0 = arith.constant 0 : i32
    %c0_i32_1 = arith.constant 0 : i32
    return %arg0, %c0_i32, %c0_i32_0 : i32, i32, i32
  }
  func.func @transform_3(%arg0: i32, %arg1: i32, %arg2: i32) -> (i32, i32, i32) {
    %c0_i32 = arith.constant 0 : i32
    %c0_i32_0 = arith.constant 0 : i32
    %c0_i32_1 = arith.constant 0 : i32
    return %arg0, %c0_i32, %c0_i32_0 : i32, i32, i32
  }
  func.func @transform_4(%arg0: i32, %arg1: i32, %arg2: i32) -> (i32, i32, i32) {
    %c0_i32 = arith.constant 0 : i32
    %c0_i32_0 = arith.constant 0 : i32
    %c0_i32_1 = arith.constant 0 : i32
    return %arg0, %c0_i32, %c0_i32_0 : i32, i32, i32
  }
  func.func @transform_5(%arg0: i32, %arg1: i32, %arg2: i32) -> (i32, i32, i32) {
    %c0_i32 = arith.constant 0 : i32
    %c0_i32_0 = arith.constant 0 : i32
    return %arg0, %arg1, %c0_i32 : i32, i32, i32
  }
}

</mosaic_0001>

<llo_original>
// kernel: baseline_forward.1
$region0: #{baseline_forward.1}
  #allocation0 [shape = 'u32[]', space=smem, size = 0x4, offset = 0x4, fixed_abs, tag = 'smem constant byte address 0x4 - core index']
  #allocation1 [shape = 'u32[72,128]{1,0:T(1,128)}', space=vmem, size = 0x9000, scoped, tag = 'internal scratch']
  #allocation2 [shape = 'f32[8,1]{1,0:T(8,128)}', space=vmem, size = 0x1000, scoped, tag = 'scratch operand']
  %s0 = inlined_call_operand.vmem [shape: f32[2,8,256], index: 0, kind: input, shape index: {}]
  %s1 = inlined_call_operand.vmem [shape: f32[2,256,32], index: 1, kind: input, shape index: {}]
  %s2 = inlined_call_operand.vmem [shape: f32[2,1,32], index: 2, kind: input, shape index: {}]
  %s3 = inlined_call_operand.vmem [shape: f32[2,32,1], index: 3, kind: input, shape index: {}]
  %s4 = inlined_call_operand.vmem [shape: f32[2,1,1], index: 4, kind: input, shape index: {}]
  %s5 = inlined_call_operand.vmem [shape: f32[2,8,1], index: 5, kind: output, shape index: {}]
  %s6 = sld [smem:[#allocation0]]
  $region61: #{baseline_forward.1} parent=0
    _
  %s8 = ssub.s32 1, %s6
  %s9 = scalar_select 0, %s8, %s6
  loop: start=0, step=1, limit=4
  $region2: #{baseline_forward.1} parent=0 // loop_pre_header
    _
  $region3: #{baseline_forward.1} parent=0 // loop_header
    %s11 = sphi 0, %s15
    %p12 = scmp.ge.s32.totalorder %s11, 4
    %s18 = sphi 0, %s37
    %s19 = sphi 0, %s33
    %s20 = sphi 0, %s29
    %s21 = sphi 0, %s18
    %s22 = sphi 0, %s19
    %s23 = sphi 0, %s20
    %s24 = sphi 0, %s21
    %s25 = sphi 0, %s22
    %s26 = sphi 0, %s23
    %s44 = sphi 0, %s46
    %s47 = sphi 0, %s44
    %s48 = sphi 0, %s47
    %s64 = sphi 0, %s48
    %s72 = sphi 0, %s74
    %s75 = sphi 0, %s72
    %s76 = sphi 0, %s75
    %s92 = sphi 0, %s76
    %s98 = sphi 0, %s100
    %s101 = sphi 0, %s98
    %s102 = sphi 0, %s101
    %s118 = sphi 0, %s102
    %s124 = sphi 0, %s126
    %s127 = sphi 0, %s124
    %s128 = sphi 0, %s127
    %s144 = sphi 0, %s128
    %s150 = sphi 0, %s152
    %s153 = sphi 0, %s150
    %s154 = sphi 0, %s153
    %s170 = sphi 0, %s154
    %s178 = sphi 0, %s180
    %s181 = sphi 0, %s178
    %s182 = sphi 0, %s181
    %s198 = sphi 0, %s182
  $region4: #{baseline_forward.1} parent=0 // loop_header_branch
    %14 = sbr.rel (%p12) target = $region8
  $region5: #{baseline_forward.1} parent=0 // loop_body
    %s16 = ssub.s32 %s11, 1
    %s17 = ssub.s32 %s11, 2
    %s27 = sadd.s32 1, %s20
    %p28 = scmp.ge.s32.totalorder %s27, 1
    %s29 = scalar_select %p28, 0, %s27
    %s30 = sadd.s32 1, %s19
    %s31 = scalar_select %p28, %s30, %s19
    %p32 = scmp.ge.s32.totalorder %s31, 1
    %s33 = scalar_select %p32, 0, %s31
    %s34 = sadd.s32 1, %s18
    %s35 = scalar_select %p32, %s34, %s18
    %p36 = scmp.ge.s32.totalorder %s35, 2
    %s37 = scalar_select %p36, 0, %s35
    %s38 = ssub.s32 %s18, %s37
    %s39 = ssub.s32 %s19, %s33
    %s40 = sor.u32 %s38, %s39
    %s41 = ssub.s32 %s20, %s29
    %s42 = sor.u32 %s40, %s41
    %p43 = scmp.eq.s32.totalorder %s42, 0
    %s45 = sadd.s32 %s44, 1
    %s46 = scalar_select %p43, %s44, %s45
    %p49 = pneg %p43
    %p50 = scmp.eq.s32.totalorder %s11, 1
    %p51 = por %p49, %p50
    %p52 = scmp.ne.s32.totalorder %s44, %s47
    %p53 = scmp.eq.s32.totalorder %s11, 0
    %p54 = por %p52, %p53
    %p55 = scmp.ne.s32.totalorder %s44, %s47
    %p56 = scmp.eq.s32.totalorder %s16, 1
    %p57 = por %p55, %p56
    %p58 = scmp.ne.s32.totalorder %s47, %s48
    %p59 = scmp.eq.s32.totalorder %s16, 0
    %p60 = por %p58, %p59
    %p61 = scmp.ne.s32.totalorder %s47, %s48
    %p62 = scmp.eq.s32.totalorder %s17, 1
    %p63 = por %p61, %p62
    %p65 = scmp.ne.s32.totalorder %s48, %s64
    %p66 = scmp.eq.s32.totalorder %s17, 0
    %p67 = por %p65, %p66
    %s68 = ssub.s32 %s18, %s37
    %s69 = ssub.s32 %s20, %s29
    %s70 = sor.u32 %s68, %s69
    %p71 = scmp.eq.s32.totalorder %s70, 0
    %s73 = sadd.s32 %s72, 1
    %s74 = scalar_select %p71, %s72, %s73
    %p77 = pneg %p71
    %p78 = scmp.eq.s32.totalorder %s11, 1
    %p79 = por %p77, %p78
    %p80 = scmp.ne.s32.totalorder %s72, %s75
    %p81 = scmp.eq.s32.totalorder %s11, 0
    %p82 = por %p80, %p81
    %p83 = scmp.ne.s32.totalorder %s72, %s75
    %p84 = scmp.eq.s32.totalorder %s16, 1
    %p85 = por %p83, %p84
    %p86 = scmp.ne.s32.totalorder %s75, %s76
    %p87 = scmp.eq.s32.totalorder %s16, 0
    %p88 = por %p86, %p87
    %p89 = scmp.ne.s32.totalorder %s75, %s76
    %p90 = scmp.eq.s32.totalorder %s17, 1
    %p91 = por %p89, %p90
    %p93 = scmp.ne.s32.totalorder %s76, %s92
    %p94 = scmp.eq.s32.totalorder %s17, 0
    %p95 = por %p93, %p94
    %s96 = ssub.s32 %s18, %s37
    %p97 = scmp.eq.s32.totalorder %s96, 0
    %s99 = sadd.s32 %s98, 1
    %s100 = scalar_select %p97, %s98, %s99
    %p103 = pneg %p97
    %p104 = scmp.eq.s32.totalorder %s11, 1
    %p105 = por %p103, %p104
    %p106 = scmp.ne.s32.totalorder %s98, %s101
    %p107 = scmp.eq.s32.totalorder %s11, 0
    %p108 = por %p106, %p107
    %p109 = scmp.ne.s32.totalorder %s98, %s101
    %p110 = scmp.eq.s32.totalorder %s16, 1
    %p111 = por %p109, %p110
    %p112 = scmp.ne.s32.totalorder %s101, %s102
    %p113 = scmp.eq.s32.totalorder %s16, 0
    %p114 = por %p112, %p113
    %p115 = scmp.ne.s32.totalorder %s101, %s102
    %p116 = scmp.eq.s32.totalorder %s17, 1
    %p117 = por %p115, %p116
    %p119 = scmp.ne.s32.totalorder %s102, %s118
    %p120 = scmp.eq.s32.totalorder %s17, 0
    %p121 = por %p119, %p120
    %s122 = ssub.s32 %s18, %s37
    %p123 = scmp.eq.s32.totalorder %s122, 0
    %s125 = sadd.s32 %s124, 1
    %s126 = scalar_select %p123, %s124, %s125
    %p129 = pneg %p123
    %p130 = scmp.eq.s32.totalorder %s11, 1
    %p131 = por %p129, %p130
    %p132 = scmp.ne.s32.totalorder %s124, %s127
    %p133 = scmp.eq.s32.totalorder %s11, 0
    %p134 = por %p132, %p133
    %p135 = scmp.ne.s32.totalorder %s124, %s127
    %p136 = scmp.eq.s32.totalorder %s16, 1
    %p137 = por %p135, %p136
    %p138 = scmp.ne.s32.totalorder %s127, %s128
    %p139 = scmp.eq.s32.totalorder %s16, 0
    %p140 = por %p138, %p139
    %p141 = scmp.ne.s32.totalorder %s127, %s128
    %p142 = scmp.eq.s32.totalorder %s17, 1
    %p143 = por %p141, %p142
    %p145 = scmp.ne.s32.totalorder %s128, %s144
    %p146 = scmp.eq.s32.totalorder %s17, 0
    %p147 = por %p145, %p146
    %s148 = ssub.s32 %s18, %s37
    %p149 = scmp.eq.s32.totalorder %s148, 0
    %s151 = sadd.s32 %s150, 1
    %s152 = scalar_select %p149, %s150, %s151
    %p155 = pneg %p149
    %p156 = scmp.eq.s32.totalorder %s11, 1
    %p157 = por %p155, %p156
    %p158 = scmp.ne.s32.totalorder %s150, %s153
    %p159 = scmp.eq.s32.totalorder %s11, 0
    %p160 = por %p158, %p159
    %p161 = scmp.ne.s32.totalorder %s150, %s153
    %p162 = scmp.eq.s32.totalorder %s16, 1
    %p163 = por %p161, %p162
    %p164 = scmp.ne.s32.totalorder %s153, %s154
    %p165 = scmp.eq.s32.totalorder %s16, 0
    %p166 = por %p164, %p165
    %p167 = scmp.ne.s32.totalorder %s153, %s154
    %p168 = scmp.eq.s32.totalorder %s17, 1
    %p169 = por %p167, %p168
    %p171 = scmp.ne.s32.totalorder %s154, %s170
    %p172 = scmp.eq.s32.totalorder %s17, 0
    %p173 = por %p171, %p172
    %s174 = ssub.s32 %s18, %s37
    %s175 = ssub.s32 %s19, %s33
    %s176 = sor.u32 %s174, %s175
    %p177 = scmp.eq.s32.totalorder %s176, 0
    %s179 = sadd.s32 %s178, 1
    %s180 = scalar_select %p177, %s178, %s179
    %p183 = pneg %p177
    %p184 = scmp.eq.s32.totalorder %s11, 1
    %p185 = por %p183, %p184
    %p186 = scmp.ne.s32.totalorder %s178, %s181
    %p187 = scmp.eq.s32.totalorder %s11, 0
    %p188 = por %p186, %p187
    %p189 = scmp.ne.s32.totalorder %s178, %s181
    %p190 = scmp.eq.s32.totalorder %s16, 1
    %p191 = por %p189, %p190
    %p192 = scmp.ne.s32.totalorder %s181, %s182
    %p193 = scmp.eq.s32.totalorder %s16, 0
    %p194 = por %p192, %p193
    %p195 = scmp.ne.s32.totalorder %s181, %s182
    %p196 = scmp.eq.s32.totalorder %s17, 1
    %p197 = por %p195, %p196
    %p199 = scmp.ne.s32.totalorder %s182, %s198
    %p200 = scmp.eq.s32.totalorder %s17, 0
    %p201 = por %p199, %p200
    %p202 = scmp.le.s32.totalorder 1, %s11
    %p203 = scmp.lt.s32.totalorder %s11, 3
    %p204 = pnand %p202, %p203
    %p205 = pneg %p204
    // Predicated region
    $region9: #{baseline_forward.1} parent=5 // pred_check
      _
    $region10: #{baseline_forward.1} parent=5 // pred_check_branch
      %207 = sbr.rel (%p204) target = $region12
    $region11: #{baseline_forward.1} parent=5 // pred_region
      %s208 = ssub.s32 %s11, 1
    $region12: #{baseline_forward.1} parent=5 // pred_fallthru
      _
    %p209 = scmp.lt.s32.totalorder %s11, 2
    // Predicated region
    $region13: #{baseline_forward.1} parent=5 // pred_check
      %p210 = pneg %p209
    $region14: #{baseline_forward.1} parent=5 // pred_check_branch
      %212 = sbr.rel (%p210) target = $region16
    $region15: #{baseline_forward.1} parent=5 // pred_region
      // Predicated region
      $region17: #{baseline_forward.1} parent=15 // pred_check
        %p213 = pneg %p54
      $region18: #{baseline_forward.1} parent=15 // pred_check_branch
        %215 = sbr.rel (%p213) target = $region20
      $region19: #{baseline_forward.1} parent=15 // pred_region
        %s216 = smul.u32 2, %s20
        %p217 = scmp.lt.s32.totalorder %s18, 1
        %s218 = scalar_select %p217, %s18, 1
        %p219 = scmp.lt.s32.totalorder %s19, 0
        %s220 = scalar_select %p219, %s19, 0
        %p221 = scmp.lt.s32.totalorder %s216, 1
        %s222 = scalar_select %p221, %s216, 1
        %s223 = smul.addr %s220, 2
        %s224 = sadd.s32 %s222, %s223
        %s225 = smul.addr %s218, 2
        %s226 = sadd.s32 %s224, %s225
        %s227 = smul.addr %s226, 8
        %s228 = scalar_lea.vmem %s0, %s227
        %s229 = smul.u32 2, %s20
      $region20: #{baseline_forward.1} parent=15 // pred_fallthru
        _
      // Predicated region
      $region21: #{baseline_forward.1} parent=15 // pred_check
        %p230 = pneg %p82
      $region22: #{baseline_forward.1} parent=15 // pred_check_branch
        %232 = sbr.rel (%p230) target = $region24
      $region23: #{baseline_forward.1} parent=15 // pred_region
        %s233 = smul.u32 32, %s20
        %p234 = scmp.lt.s32.totalorder %s18, 1
        %s235 = scalar_select %p234, %s18, 1
        %p236 = scmp.lt.s32.totalorder %s233, 31
        %s237 = scalar_select %p236, %s233, 31
        %s238 = smul.addr %s235, 32
        %s239 = sadd.s32 %s237, %s238
        %s240 = smul.addr %s239, 8
        %s241 = scalar_lea.vmem %s1, %s240
        %s242 = smul.u32 32, %s20
      $region24: #{baseline_forward.1} parent=15 // pred_fallthru
        _
      // Predicated region
      $region25: #{baseline_forward.1} parent=15 // pred_check
        %p243 = pneg %p108
      $region26: #{baseline_forward.1} parent=15 // pred_check_branch
        %245 = sbr.rel (%p243) target = $region28
      $region27: #{baseline_forward.1} parent=15 // pred_region
        %p246 = scmp.lt.s32.totalorder %s18, 1
        %s247 = scalar_select %p246, %s18, 1
        %s248 = scalar_lea.vmem %s2, %s247
      $region28: #{baseline_forward.1} parent=15 // pred_fallthru
        _
      // Predicated region
      $region29: #{baseline_forward.1} parent=15 // pred_check
        %p249 = pneg %p134
      $region30: #{baseline_forward.1} parent=15 // pred_check_branch
        %251 = sbr.rel (%p249) target = $region32
      $region31: #{baseline_forward.1} parent=15 // pred_region
        %p252 = scmp.lt.s32.totalorder %s18, 1
        %s253 = scalar_select %p252, %s18, 1
        %s254 = smul.addr %s253, 4
        %s255 = smul.addr %s254, 8
        %s256 = scalar_lea.vmem %s3, %s255
      $region32: #{baseline_forward.1} parent=15 // pred_fallthru
        _
      // Predicated region
      $region33: #{baseline_forward.1} parent=15 // pred_check
        %p257 = pneg %p160
      $region34: #{baseline_forward.1} parent=15 // pred_check_branch
        %259 = sbr.rel (%p257) target = $region36
      $region35: #{baseline_forward.1} parent=15 // pred_region
        %p260 = scmp.lt.s32.totalorder %s18, 1
        %s261 = scalar_select %p260, %s18, 1
        %s262 = scalar_lea.vmem %s4, %s261
      $region36: #{baseline_forward.1} parent=15 // pred_fallthru
        _
    $region16: #{baseline_forward.1} parent=5 // pred_fallthru
      _
    %p263 = scmp.le.s32.totalorder 1, %s11
    %p264 = scmp.lt.s32.totalorder %s11, 3
    %p265 = pnand %p263, %p264
    %p266 = pneg %p265
    // Predicated region
    $region37: #{baseline_forward.1} parent=5 // pred_check
      _
    $region38: #{baseline_forward.1} parent=5 // pred_check_branch
      %268 = sbr.rel (%p265) target = $region40
    $region39: #{baseline_forward.1} parent=5 // pred_region
      %s269 = ssub.s32 %s11, 1
      %s270 = smul.u32 2, %s23
      %p271 = scmp.lt.s32.totalorder %s21, 1
      %s272 = scalar_select %p271, %s21, 1
      %p273 = scmp.lt.s32.totalorder %s22, 0
      %s274 = scalar_select %p273, %s22, 0
      %p275 = scmp.lt.s32.totalorder %s270, 1
      %s276 = scalar_select %p275, %s270, 1
      %s277 = smul.addr %s274, 2
      %s278 = sadd.s32 %s276, %s277
      %s279 = smul.addr %s272, 2
      %s280 = sadd.s32 %s278, %s279
      %s281 = smul.addr %s280, 8
      %s282 = scalar_lea.vmem %s0, %s281
      %p283 = pneg %p60
      %p284 = pneg %p57
      %s285 = smul.u32 32, %s23
      %p286 = scmp.lt.s32.totalorder %s21, 1
      %s287 = scalar_select %p286, %s21, 1
      %p288 = scmp.lt.s32.totalorder %s285, 31
      %s289 = scalar_select %p288, %s285, 31
      %s290 = smul.addr %s287, 32
      %s291 = sadd.s32 %s289, %s290
      %s292 = smul.addr %s291, 8
      %s293 = scalar_lea.vmem %s1, %s292
      %p294 = pneg %p88
      %p295 = pneg %p85
      %p296 = scmp.lt.s32.totalorder %s21, 1
      %s297 = scalar_select %p296, %s21, 1
      %s298 = scalar_lea.vmem %s2, %s297
      %p299 = pneg %p114
      %p300 = pneg %p111
      %p301 = scmp.lt.s32.totalorder %s21, 1
      %s302 = scalar_select %p301, %s21, 1
      %s303 = smul.addr %s302, 4
      %s304 = smul.addr %s303, 8
      %s305 = scalar_lea.vmem %s3, %s304
      %p306 = pneg %p140
      %p307 = pneg %p137
      %p308 = scmp.lt.s32.totalorder %s21, 1
      %s309 = scalar_select %p308, %s21, 1
      %s310 = scalar_lea.vmem %s4, %s309
      %p311 = pneg %p166
      %p312 = pneg %p163
      %p313 = pneg %p194
      %p314 = pneg %p191
      %p315 = scmp.lt.s32.totalorder %s21, 1
      %s316 = scalar_select %p315, %s21, 1
      %p317 = scmp.lt.s32.totalorder %s22, 0
      %s318 = scalar_select %p317, %s22, 0
      %s319 = sadd.s32 %s318, %s316
      %s320 = smul.addr %s319, 8
      %s321 = scalar_lea.vmem %s5, %s320
      %s322 = smul.u32 2, %s23
      %p323 = scmp.lt.s32.totalorder %s21, 1
      %s324 = scalar_select %p323, %s21, 1
      %p325 = scmp.lt.s32.totalorder %s22, 0
      %s326 = scalar_select %p325, %s22, 0
      %p327 = scmp.lt.s32.totalorder %s322, 1
      %s328 = scalar_select %p327, %s322, 1
      %s329 = smul.addr %s326, 2
      %s330 = sadd.s32 %s328, %s329
      %s331 = smul.addr %s324, 2
      %s332 = sadd.s32 %s330, %s331
      %s333 = smul.addr %s332, 8
      %s334 = scalar_lea.vmem %s0, %s333
      %s335 = smul.u32 2, %s23
      %s336 = smul.u32 32, %s23
      %p337 = scmp.lt.s32.totalorder %s21, 1
      %s338 = scalar_select %p337, %s21, 1
      %p339 = scmp.lt.s32.totalorder %s336, 31
      %s340 = scalar_select %p339, %s336, 31
      %s341 = smul.addr %s338, 32
      %s342 = sadd.s32 %s340, %s341
      %s343 = smul.addr %s342, 8
      %s344 = scalar_lea.vmem %s1, %s343
      %s345 = smul.u32 32, %s23
      %p346 = scmp.lt.s32.totalorder %s21, 1
      %s347 = scalar_select %p346, %s21, 1
      %s348 = scalar_lea.vmem %s2, %s347
      %p349 = scmp.lt.s32.totalorder %s21, 1
      %s350 = scalar_select %p349, %s21, 1
      %s351 = smul.addr %s350, 4
      %s352 = smul.addr %s351, 8
      %s353 = scalar_lea.vmem %s3, %s352
      %p354 = scmp.lt.s32.totalorder %s21, 1
      %s355 = scalar_select %p354, %s21, 1
      %s356 = scalar_lea.vmem %s4, %s355
      %p357 = scmp.lt.s32.totalorder %s21, 1
      %s358 = scalar_select %p357, %s21, 1
      %p359 = scmp.lt.s32.totalorder %s22, 0
      %s360 = scalar_select %p359, %s22, 0
      %s361 = sadd.s32 %s360, %s358
      %s362 = smul.addr %s361, 8
      %s363 = scalar_lea.vmem %s5, %s362
      %p364 = scmp.eq.s32.totalorder %s23, 0
      // Predicated region
      $region41: #{baseline_forward.1} parent=39 // pred_check
        %p365 = pneg %p364
      $region42: #{baseline_forward.1} parent=39 // pred_check_branch
        %367 = sbr.rel (%p365) target = $region44
      $region43: #{baseline_forward.1} parent=39 // pred_region
        %vm368 = vcmask 7168
        %369 = vst.msk [vmem:[#allocation2] sm:$0xff] %vm368, 0.0
      $region44: #{baseline_forward.1} parent=39 // pred_fallthru
        _
      %v370 = vld [vmem:[%s334] sm:$0xff]
      %v371 = vld [vmem:[%s334 + $0x8] sm:$0xff]
      %v372 = vld [vmem:[%s344] sm:$0xff]
      %v373 = vld [vmem:[%s344 + $0x8] sm:$0xff]
      %v374 = vld [vmem:[%s344 + $0x10] sm:$0xff]
      %v375 = vld [vmem:[%s344 + $0x18] sm:$0xff]
      %v376 = vld [vmem:[%s344 + $0x20] sm:$0xff]
      %v377 = vld [vmem:[%s344 + $0x28] sm:$0xff]
      %v378 = vld [vmem:[%s344 + $0x30] sm:$0xff]
      %v379 = vld [vmem:[%s344 + $0x38] sm:$0xff]
      %v380 = vld [vmem:[%s344 + $0x40] sm:$0xff]
      %v381 = vld [vmem:[%s344 + $0x48] sm:$0xff]
      %v382 = vld [vmem:[%s344 + $0x50] sm:$0xff]
      %v383 = vld [vmem:[%s344 + $0x58] sm:$0xff]
      %v384 = vld [vmem:[%s344 + $0x60] sm:$0xff]
      %v385 = vld [vmem:[%s344 + $0x68] sm:$0xff]
      %v386 = vld [vmem:[%s344 + $0x70] sm:$0xff]
      %v387 = vld [vmem:[%s344 + $0x78] sm:$0xff]
      %v388 = vld [vmem:[%s344 + $0x80] sm:$0xff]
      %v389 = vld [vmem:[%s344 + $0x88] sm:$0xff]
      %v390 = vld [vmem:[%s344 + $0x90] sm:$0xff]
      %v391 = vld [vmem:[%s344 + $0x98] sm:$0xff]
      %v392 = vld [vmem:[%s344 + $0xa0] sm:$0xff]
      %v393 = vld [vmem:[%s344 + $0xa8] sm:$0xff]
      %v394 = vld [vmem:[%s344 + $0xb0] sm:$0xff]
      %v395 = vld [vmem:[%s344 + $0xb8] sm:$0xff]
      %v396 = vld [vmem:[%s344 + $0xc0] sm:$0xff]
      %v397 = vld [vmem:[%s344 + $0xc8] sm:$0xff]
      %v398 = vld [vmem:[%s344 + $0xd0] sm:$0xff]
      %v399 = vld [vmem:[%s344 + $0xd8] sm:$0xff]
      %v400 = vld [vmem:[%s344 + $0xe0] sm:$0xff]
      %v401 = vld [vmem:[%s344 + $0xe8] sm:$0xff]
      %v402 = vld [vmem:[%s344 + $0xf0] sm:$0xff]
      %v403 = vld [vmem:[%s344 + $0xf8] sm:$0xff]
      %v404 = vld [vmem:[%s353] sm:$0xff]
      %v405 = vld [vmem:[%s353 + $0x8] sm:$0xff]
      %v406 = vld [vmem:[%s353 + $0x10] sm:$0xff]
      %v407 = vld [vmem:[%s353 + $0x18] sm:$0xff]
      %vm408 = vcmask 261120
      %v410 = vsel %vm408, %v372, 0
      %v413 = vsel %vm408, %v373, 0
      %v416 = vsel %vm408, %v374, 0
      %v419 = vsel %vm408, %v375, 0
      %v422 = vsel %vm408, %v376, 0
      %v425 = vsel %vm408, %v377, 0
      %v428 = vsel %vm408, %v378, 0
      %v431 = vsel %vm408, %v379, 0
      %v434 = vsel %vm408, %v380, 0
      %v437 = vsel %vm408, %v381, 0
      %v440 = vsel %vm408, %v382, 0
      %v443 = vsel %vm408, %v383, 0
      %v446 = vsel %vm408, %v384, 0
      %v449 = vsel %vm408, %v385, 0
      %v452 = vsel %vm408, %v386, 0
      %v455 = vsel %vm408, %v387, 0
      %v458 = vsel %vm408, %v388, 0
      %v461 = vsel %vm408, %v389, 0
      %v464 = vsel %vm408, %v390, 0
      %v467 = vsel %vm408, %v391, 0
      %v470 = vsel %vm408, %v392, 0
      %v473 = vsel %vm408, %v393, 0
      %v476 = vsel %vm408, %v394, 0
      %v479 = vsel %vm408, %v395, 0
      %v482 = vsel %vm408, %v396, 0
      %v485 = vsel %vm408, %v397, 0
      %v488 = vsel %vm408, %v398, 0
      %v491 = vsel %vm408, %v399, 0
      %v494 = vsel %vm408, %v400, 0
      %v497 = vsel %vm408, %v401, 0
      %v500 = vsel %vm408, %v402, 0
      %v503 = vsel %vm408, %v403, 0
      %505 = vmatpush.msra.mxu0 0.0
      %506 = vmatpush.msra.mxu0 0.0
      %507 = vmatpush.msra.mxu0 0.0
      %508 = vmatpush.msra.mxu0 0.0
      %509 = vmatpush.msra.mxu0 0.0
      %510 = vmatpush.msra.mxu0 0.0
      %511 = vmatpush.msra.mxu0 0.0
      %512 = vmatpush.msra.mxu0 0.0
      %513 = vmatpush.msra.mxu0 0.0
      %514 = vmatpush.msra.mxu0 0.0
      %515 = vmatpush.msra.mxu0 0.0
      %516 = vmatpush.msra.mxu0 0.0
      %517 = vmatpush.msra.mxu0 %v407
      %518 = vmatpush.msra.mxu0 %v406
      %519 = vmatpush.msra.mxu0 %v405
      %520 = vmatpush.msra.mxu0 %v404
      %521 = vmatmul.f32.gmra.mxu0 %v410
      %v522 = vpop.f32.mrf.mxu0
      %v523 = vadd.f32 0.0, %v522
      %524 = vmatmul.f32.gmra.mxu0 %v413
      %v525 = vpop.f32.mrf.mxu0
      %v526 = vadd.f32 0.0, %v525
      %527 = vmatmul.f32.gmra.mxu0 %v416
      %v528 = vpop.f32.mrf.mxu0
      %v529 = vadd.f32 0.0, %v528
      %530 = vmatmul.f32.gmra.mxu0 %v419
      %v531 = vpop.f32.mrf.mxu0
      %v532 = vadd.f32 0.0, %v531
      %533 = vmatmul.f32.gmra.mxu0 %v422
      %v534 = vpop.f32.mrf.mxu0
      %v535 = vadd.f32 0.0, %v534
      %536 = vmatmul.f32.gmra.mxu0 %v425
      %v537 = vpop.f32.mrf.mxu0
      %v538 = vadd.f32 0.0, %v537
      %539 = vmatmul.f32.gmra.mxu0 %v428
      %v540 = vpop.f32.mrf.mxu0
      %v541 = vadd.f32 0.0, %v540
      %542 = vmatmul.f32.gmra.mxu0 %v431
      %v543 = vpop.f32.mrf.mxu0
      %v544 = vadd.f32 0.0, %v543
      %545 = vmatmul.f32.gmra.mxu0 %v434
      %v546 = vpop.f32.mrf.mxu0
      %v547 = vadd.f32 0.0, %v546
      %548 = vmatmul.f32.gmra.mxu0 %v437
      %v549 = vpop.f32.mrf.mxu0
      %v550 = vadd.f32 0.0, %v549
      %551 = vmatmul.f32.gmra.mxu0 %v440
      %v552 = vpop.f32.mrf.mxu0
      %v553 = vadd.f32 0.0, %v552
      %554 = vmatmul.f32.gmra.mxu0 %v443
      %v555 = vpop.f32.mrf.mxu0
      %v556 = vadd.f32 0.0, %v555
      %557 = vmatmul.f32.gmra.mxu0 %v446
      %v558 = vpop.f32.mrf.mxu0
      %v559 = vadd.f32 0.0, %v558
      %560 = vmatmul.f32.gmra.mxu0 %v449
      %v561 = vpop.f32.mrf.mxu0
      %v562 = vadd.f32 0.0, %v561
      %563 = vmatmul.f32.gmra.mxu0 %v452
      %v564 = vpop.f32.mrf.mxu0
      %v565 = vadd.f32 0.0, %v564
      %566 = vmatmul.f32.gmra.mxu0 %v455
      %v567 = vpop.f32.mrf.mxu0
      %v568 = vadd.f32 0.0, %v567
      %569 = vmatmul.f32.gmra.mxu0 %v458
      %v570 = vpop.f32.mrf.mxu0
      %v571 = vadd.f32 0.0, %v570
      %572 = vmatmul.f32.gmra.mxu0 %v461
      %v573 = vpop.f32.mrf.mxu0
      %v574 = vadd.f32 0.0, %v573
      %575 = vmatmul.f32.gmra.mxu0 %v464
      %v576 = vpop.f32.mrf.mxu0
      %v577 = vadd.f32 0.0, %v576
      %578 = vmatmul.f32.gmra.mxu0 %v467
      %v579 = vpop.f32.mrf.mxu0
      %v580 = vadd.f32 0.0, %v579
      %581 = vmatmul.f32.gmra.mxu0 %v470
      %v582 = vpop.f32.mrf.mxu0
      %v583 = vadd.f32 0.0, %v582
      %584 = vmatmul.f32.gmra.mxu0 %v473
      %v585 = vpop.f32.mrf.mxu0
      %v586 = vadd.f32 0.0, %v585
      %587 = vmatmul.f32.gmra.mxu0 %v476
      %v588 = vpop.f32.mrf.mxu0
      %v589 = vadd.f32 0.0, %v588
      %590 = vmatmul.f32.gmra.mxu0 %v479
      %v591 = vpop.f32.mrf.mxu0
      %v592 = vadd.f32 0.0, %v591
      %593 = vmatmul.f32.gmra.mxu0 %v482
      %v594 = vpop.f32.mrf.mxu0
      %v595 = vadd.f32 0.0, %v594
      %596 = vmatmul.f32.gmra.mxu0 %v485
      %v597 = vpop.f32.mrf.mxu0
      %v598 = vadd.f32 0.0, %v597
      %599 = vmatmul.f32.gmra.mxu0 %v488
      %v600 = vpop.f32.mrf.mxu0
      %v601 = vadd.f32 0.0, %v600
      %602 = vmatmul.f32.gmra.mxu0 %v491
      %v603 = vpop.f32.mrf.mxu0
      %v604 = vadd.f32 0.0, %v603
      %605 = vmatmul.f32.gmra.mxu0 %v494
      %v606 = vpop.f32.mrf.mxu0
      %v607 = vadd.f32 0.0, %v606
      %608 = vmatmul.f32.gmra.mxu0 %v497
      %v609 = vpop.f32.mrf.mxu0
      %v610 = vadd.f32 0.0, %v609
      %611 = vmatmul.f32.gmra.mxu0 %v500
      %v612 = vpop.f32.mrf.mxu0
      %v613 = vadd.f32 0.0, %v612
      %614 = vmatmul.f32.gmra.mxu0 %v503
      %v615 = vpop.f32.mrf.mxu0
      %v616 = vadd.f32 0.0, %v615
      %617 = vdwg.mxu0
      %v618 = vld [vmem:[#allocation2] sm:$0xff]
      %619 = vmatpush.msra.mxu0 %v568
      %620 = vmatpush.msra.mxu0 %v565
      %621 = vmatpush.msra.mxu0 %v562
      %622 = vmatpush.msra.mxu0 %v559
      %623 = vmatpush.msra.mxu0 %v556
      %624 = vmatpush.msra.mxu0 %v553
      %625 = vmatpush.msra.mxu0 %v550
      %626 = vmatpush.msra.mxu0 %v547
      %627 = vmatpush.msra.mxu0 %v544
      %628 = vmatpush.msra.mxu0 %v541
      %629 = vmatpush.msra.mxu0 %v538
      %630 = vmatpush.msra.mxu0 %v535
      %631 = vmatpush.msra.mxu0 %v532
      %632 = vmatpush.msra.mxu0 %v529
      %633 = vmatpush.msra.mxu0 %v526
      %634 = vmatpush.msra.mxu0 %v523
      %635 = vmatmul.f32.gmra.mxu0 %v370
      %v636 = vpop.f32.mrf.mxu0
      %v637 = vadd.f32 0.0, %v636
      %638 = vdwg.mxu0
      %639 = vmatpush.msra.mxu0 %v616
      %640 = vmatpush.msra.mxu0 %v613
      %641 = vmatpush.msra.mxu0 %v610
      %642 = vmatpush.msra.mxu0 %v607
      %643 = vmatpush.msra.mxu0 %v604
      %644 = vmatpush.msra.mxu0 %v601
      %645 = vmatpush.msra.mxu0 %v598
      %646 = vmatpush.msra.mxu0 %v595
      %647 = vmatpush.msra.mxu0 %v592
      %648 = vmatpush.msra.mxu0 %v589
      %649 = vmatpush.msra.mxu0 %v586
      %650 = vmatpush.msra.mxu0 %v583
      %651 = vmatpush.msra.mxu0 %v580
      %652 = vmatpush.msra.mxu0 %v577
      %653 = vmatpush.msra.mxu0 %v574
      %654 = vmatpush.msra.mxu0 %v571
      %655 = vmatmul.f32.gmra.mxu0 %v371
      %v656 = vpop.f32.mrf.mxu0
      %v657 = vadd.f32 %v637, %v656
      %658 = vdwg.mxu0
      %v659 = vadd.f32 %v618, %v657
      %vm660 = vcmask 7168
      %661 = vst.msk [vmem:[#allocation2] sm:$0xff] %vm660, %v659
      // Predicated region
      $region45: #{baseline_forward.1} parent=39 // pred_check
        %p662 = pneg %p364
      $region46: #{baseline_forward.1} parent=39 // pred_check_branch
        %664 = sbr.rel (%p662) target = $region48
      $region47: #{baseline_forward.1} parent=39 // pred_region
        %v665 = vld [vmem:[%s348] sm:$0x1]
        %v666 = vld [vmem:[%s353] sm:$0xff]
        %v667 = vld [vmem:[%s353 + $0x8] sm:$0xff]
        %v668 = vld [vmem:[%s353 + $0x10] sm:$0xff]
        %v669 = vld [vmem:[%s353 + $0x18] sm:$0xff]
        %v670 = vld [vmem:[%s356] sm:$0x1]
        %v672 = vsel %vm408, %v665, 0
        %674 = vmatpush.msra.mxu0 0.0
        %675 = vmatpush.msra.mxu0 0.0
        %676 = vmatpush.msra.mxu0 0.0
        %677 = vmatpush.msra.mxu0 0.0
        %678 = vmatpush.msra.mxu0 0.0
        %679 = vmatpush.msra.mxu0 0.0
        %680 = vmatpush.msra.mxu0 0.0
        %681 = vmatpush.msra.mxu0 0.0
        %682 = vmatpush.msra.mxu0 0.0
        %683 = vmatpush.msra.mxu0 0.0
        %684 = vmatpush.msra.mxu0 0.0
        %685 = vmatpush.msra.mxu0 0.0
        %686 = vmatpush.msra.mxu0 %v669
        %687 = vmatpush.msra.mxu0 %v668
        %688 = vmatpush.msra.mxu0 %v667
        %689 = vmatpush.msra.mxu0 %v666
        %690 = vmatmul.f32.gmra.mxu0 %v672
        %v691 = vpop.f32.mrf.mxu0
        %v692 = vadd.f32 %v670, %v691
        %693 = vdwg.mxu0
        %v694 = vld [vmem:[#allocation2] sm:$0xff]
        %v695 = vperm.slane %v692, 0
        %v696 = vadd.f32 %v694, %v695
        %697 = vst.msk [vmem:[%s363] sm:$0xff] %vm660, %v696
      $region48: #{baseline_forward.1} parent=39 // pred_fallthru
        _
      %p698 = scmp.lt.s32.totalorder %s21, 1
      %s699 = scalar_select %p698, %s21, 1
      %p700 = scmp.lt.s32.totalorder %s22, 0
      %s701 = scalar_select %p700, %s22, 0
      %s702 = sadd.s32 %s701, %s699
      %s703 = smul.addr %s702, 8
      %s704 = scalar_lea.vmem %s5, %s703
      // Predicated region
      $region49: #{baseline_forward.1} parent=39 // pred_check
        %p705 = pneg %p191
      $region50: #{baseline_forward.1} parent=39 // pred_check_branch
        %707 = sbr.rel (%p705) target = $region52
      $region51: #{baseline_forward.1} parent=39 // pred_region
        _
      $region52: #{baseline_forward.1} parent=39 // pred_fallthru
        _
    $region40: #{baseline_forward.1} parent=5 // pred_fallthru
      _
    %p708 = scmp.le.s32.totalorder 2, %s11
    // Predicated region
    $region53: #{baseline_forward.1} parent=5 // pred_check
      %p709 = pneg %p708
    $region54: #{baseline_forward.1} parent=5 // pred_check_branch
      %711 = sbr.rel (%p709) target = $region56
    $region55: #{baseline_forward.1} parent=5 // pred_region
      %s712 = ssub.s32 %s11, 2
      // Predicated region
      $region57: #{baseline_forward.1} parent=55 // pred_check
        %p713 = pneg %p197
      $region58: #{baseline_forward.1} parent=55 // pred_check_branch
        %715 = sbr.rel (%p713) target = $region60
      $region59: #{baseline_forward.1} parent=55 // pred_region
        %p716 = scmp.lt.s32.totalorder %s24, 1
        %s717 = scalar_select %p716, %s24, 1
        %p718 = scmp.lt.s32.totalorder %s25, 0
        %s719 = scalar_select %p718, %s25, 0
        %s720 = sadd.s32 %s719, %s717
        %s721 = smul.addr %s720, 8
        %s722 = scalar_lea.vmem %s5, %s721
      $region60: #{baseline_forward.1} parent=55 // pred_fallthru
        _
    $region56: #{baseline_forward.1} parent=5 // pred_fallthru
      _
  $region6: #{baseline_forward.1} parent=0 // loop_footer
    %s15 = sadd.s32 1, %s11
  $region7: #{baseline_forward.1} parent=0 // loop_footer_branch
    %10 = sbr.rel target = $region3
  $region8: #{baseline_forward.1} parent=0 // loop_exit
    _

</llo_original>
